<compile_context>
chip_gen: v5e
topology: v5e:2x2
jax: 0.10.0
libtpu: 0.0.40
codegen_flags: <defaults>
</compile_context>

<pallas_src>
import functools

import jax
import jax.numpy as jnp
from jax.experimental import pallas as pl
from jax.experimental.pallas import tpu as pltpu


def _cdiv(a: int, b: int) -> int:
    return -(-a // b)


def _round_up(x: int, m: int) -> int:
    return _cdiv(x, m) * m


def _bigram_kernel(*refs, n_chunks, n_valid, lse_row, with_loss, with_logits):
    """One grid step handles TN = n_chunks * 128 flattened (B*T) positions.

    refs (in order): idx, [targets,] table_t, [logits_out,] [nll_out]
      idx/targets : (1, n_chunks, 128) int32  lane-dense packed token ids
      table_t     : (128, 128) f32            transposed embedding table; row
                                              `lse_row` holds logsumexp(table,-1)
      logits_out  : (n_chunks*128, 128) f32   lane-dense logits slab
      nll_out     : (1, n_chunks, 128) f32    per-position NLL (0 on padding)
    """
    it = iter(refs)
    idx_ref = next(it)
    tgt_ref = next(it) if with_loss else None
    table_ref = next(it)
    logits_ref = next(it) if with_logits else None
    nll_ref = next(it) if with_loss else None

    vp = table_ref.shape[0]                                       # 128
    idx_blk = idx_ref[...]                                        # (1, R, 128)
    # vocab id along sublanes of the transposed (vocab x rows) layout
    sub_iota = jax.lax.broadcasted_iota(jnp.int32, (vp, 128), 0)

    if with_loss:
        tgt_blk = tgt_ref[...]                                    # (1, R, 128)
        lse_mask = (sub_iota == lse_row).astype(jnp.float32)      # hoisted
        lane = jax.lax.broadcasted_iota(jnp.int32, (1, 128), 1)
        base = pl.program_id(0) * (n_chunks * 128)

    for s in range(n_chunks):                                     # static unrolled
        idx_row = idx_blk[0, s:s + 1, :]                          # (1, 128)
        onehot_t = (jnp.broadcast_to(idx_row, (vp, 128)) == sub_iota
                    ).astype(jnp.float32)                         # (Vp, 128)
        # Row gather as a transposed matmul: logits_t[c, r] = table[idx[r], c].
        logits_t = jnp.dot(table_ref[...], onehot_t,
                           preferred_element_type=jnp.float32,
                           precision=jax.lax.Precision.HIGHEST)   # (Vp, 128)

        if with_logits:
            # XLU transpose back (off the critical path) -> lane-dense store.
            logits_ref[pl.ds(s * 128, 128), :] = jnp.transpose(logits_t)

        if with_loss:
            tgt_row = tgt_blk[0, s:s + 1, :]
            tgt_onehot_t = (jnp.broadcast_to(tgt_row, (vp, 128)) == sub_iota
                            ).astype(jnp.float32)
            # nll[r] = lse[idx[r]] - table[idx[r], tgt[r]]   (one fused reduce)
            nll = jnp.sum(logits_t * (lse_mask - tgt_onehot_t),
                          axis=0, keepdims=True)                  # (1, 128)
            row = base + s * 128 + lane
            nll = nll * (row < n_valid).astype(jnp.float32)       # zero padding
            nll_ref[:, pl.ds(s, 1), :] = nll[None]                # (1,1,128) store


def bigram_forward(idx, table, targets=None, *, tile_rows=2048, return_logits=True):
    """Pallas equivalent of BigramLanguageModel.forward.

    Returns (logits[B,T,V] or None, loss or None) matching the PyTorch module
    (logits always returned unless return_logits=False on the loss path).
    """
    B, T = idx.shape
    V = table.shape[0]
    Vp = 128
    assert V < Vp, "kernel needs a spare padded vocab row for the packed lse"
    N = B * T
    LSE_ROW = V                        # spare padded row holding logsumexp rows

    with_loss = targets is not None
    with_logits = return_logits or not with_loss

    # ---- tiling: TN multiple of 128; large tiles, but >= 2 grid steps when
    #      possible so both v7x TensorCores get work. -------------------------
    n_chunks_total = _cdiv(N, 128)
    cap = max(1, _round_up(tile_rows, 128) // 128)
    want_tiles = 2 if n_chunks_total >= 2 else 1
    R = max(1, min(cap, _cdiv(n_chunks_total, want_tiles)))       # chunks / tile
    G = _cdiv(n_chunks_total, R)                                  # grid steps
    TN = R * 128
    N_pad = G * TN

    # ---- table: transpose + pack row-wise logsumexp into spare row V --------
    table_f32 = table.astype(jnp.float32)
    table_t_pad = jnp.zeros((Vp, Vp), jnp.float32)
    table_t_pad = table_t_pad.at[:V, :V].set(table_f32.T)
    if with_loss:
        lse = jax.scipy.special.logsumexp(table_f32, axis=-1)     # (V,)
        table_t_pad = table_t_pad.at[LSE_ROW, :V].set(lse)

    # ---- lane-dense packed token ids: (G, R, 128) int32 ---------------------
    def pack(a):
        flat = jnp.zeros((N_pad,), jnp.int32).at[:N].set(
            a.reshape(N).astype(jnp.int32))
        return flat.reshape(G, R, 128)

    packed_spec = pl.BlockSpec((1, R, 128), lambda i: (i, 0, 0))
    tab_spec = pl.BlockSpec((Vp, Vp), lambda i: (0, 0))           # resident
    logits_spec = pl.BlockSpec((TN, Vp), lambda i: (i, 0))
    nll_spec = pl.BlockSpec((1, R, 128), lambda i: (i, 0, 0))

    in_specs = [packed_spec]
    operands = [pack(idx)]
    if with_loss:
        in_specs.append(packed_spec)
        operands.append(pack(targets))
    in_specs.append(tab_spec)
    operands.append(table_t_pad)

    out_shapes, out_specs = [], []
    if with_logits:
        out_shapes.append(jax.ShapeDtypeStruct((N_pad, Vp), jnp.float32))
        out_specs.append(logits_spec)
    if with_loss:
        out_shapes.append(jax.ShapeDtypeStruct((G, R, 128), jnp.float32))
        out_specs.append(nll_spec)

    # VMEM: double-buffered logits tile + resident table + tiny packed tiles.
    vmem_est = 2 * TN * Vp * 4 + 2 * Vp * Vp * 4 + 6 * R * 128 * 4
    cp_kwargs = dict(dimension_semantics=("parallel",))
    if vmem_est > (12 << 20):          # only if tile_rows is pushed very high (v5e 16 MiB default)
        cp_kwargs["vmem_limit_bytes"] = int(min(2 * vmem_est, 100 << 20))
    cparams = pltpu.CompilerParams(**cp_kwargs)

    kernel = functools.partial(_bigram_kernel, n_chunks=R, n_valid=N,
                               lse_row=LSE_ROW, with_loss=with_loss,
                               with_logits=with_logits)

    outs = pl.pallas_call(
        kernel,
        out_shape=tuple(out_shapes),
        grid_spec=pltpu.PrefetchScalarGridSpec(
            num_scalar_prefetch=0, grid=(G,),
            in_specs=in_specs, out_specs=tuple(out_specs)),
        compiler_params=cparams,
    )(*operands)

    outs = list(outs) if isinstance(outs, (tuple, list)) else [outs]
    logits = None
    if with_logits:
        logits2d = outs.pop(0)
        logits = logits2d[:N, :V].reshape(B, T, V)
    loss = None
    if with_loss:
        nll = outs.pop(0)
        loss = jnp.sum(nll) / jnp.float32(N)   # mean cross-entropy over B*T
    return logits, loss


def _reference(idx, table, targets=None):
    logits = table[idx]                                            # (B, T, V)
    if targets is None:
        return logits, None
    B, T, V = logits.shape
    lf = logits.reshape(B * T, V).astype(jnp.float32)
    tf = targets.reshape(B * T)
    lse = jax.scipy.special.logsumexp(lf, axis=-1)
    loss = jnp.mean(lse - lf[jnp.arange(B * T), tf])
    return logits, loss


if __name__ == "__main__":
    V = 65                                                         # len(chars)
    key = jax.random.PRNGKey(0)
    k_tab, k_idx, k_tgt, k_idx2, k_tgt2 = jax.random.split(key, 5)
    table = jax.random.normal(k_tab, (V, V), dtype=jnp.float32)    # nn.Embedding N(0,1)

    # --- case 1: module-sized shapes (B=2, T=8) -> single 128-row tile -------
    B, T = 2, 8
    idx = jax.random.randint(k_idx, (B, T), 0, V, dtype=jnp.int32)
    targets = jax.random.randint(k_tgt, (B, T), 0, V, dtype=jnp.int32)

    logits, loss = bigram_forward(idx, table, targets)
    jax.block_until_ready((logits, loss))
    ref_logits, ref_loss = _reference(idx, table, targets)
    assert logits.shape == (B, T, V)
    assert jnp.allclose(logits, ref_logits, atol=1e-5)
    assert jnp.allclose(loss, ref_loss, atol=1e-5)

    # inference path (targets=None) -> logits-only kernel
    gen_logits, gen_loss = bigram_forward(idx, table, None)
    gen_logits = jax.block_until_ready(gen_logits)
    assert gen_loss is None
    assert jnp.allclose(gen_logits, ref_logits, atol=1e-5)

    # loss-only path (logits discarded during training)
    no_logits, loss_only = bigram_forward(idx, table, targets, return_logits=False)
    loss_only = jax.block_until_ready(loss_only)
    assert no_logits is None
    assert jnp.allclose(loss_only, ref_loss, atol=1e-5)

    # --- case 2: multi-tile / multi-chunk grid with padded rows --------------
    B2, T2 = 4, 96                                                 # N=384 -> G=2, R=2
    idx2 = jax.random.randint(k_idx2, (B2, T2), 0, V, dtype=jnp.int32)
    targets2 = jax.random.randint(k_tgt2, (B2, T2), 0, V, dtype=jnp.int32)
    logits2, loss2 = bigram_forward(idx2, table, targets2, tile_rows=256)
    jax.block_until_ready((logits2, loss2))
    ref_logits2, ref_loss2 = _reference(idx2, table, targets2)
    assert jnp.allclose(logits2, ref_logits2, atol=1e-5)
    assert jnp.allclose(loss2, ref_loss2, atol=1e-5)

    print("KERNEL_OK")
</pallas_src>

<mosaic_0001>
module attributes {stable_mosaic.version = 11 : i64} {
  func.func @_bigram_kernel(%arg0: i32, %arg1: memref<1x1x128xi32, #tpu.memory_space<vmem>>, %arg2: memref<1x1x128xi32, #tpu.memory_space<vmem>>, %arg3: memref<128x128xf32, #tpu.memory_space<vmem>>, %arg4: memref<128x128xf32, #tpu.memory_space<vmem>>, %arg5: memref<1x1x128xf32, #tpu.memory_space<vmem>>) attributes {dimension_semantics = [#tpu.dimension_semantics<parallel>], iteration_bounds = array<i64: 1>, scalar_prefetch = 0 : i64, scratch_operands = 0 : i64, tpu.core_type = #tpu.core_type<tc>, window_params = [{transform_indices = @transform_0, window_bounds = array<i64: 1, 1, 128>}, {transform_indices = @transform_1, window_bounds = array<i64: 1, 1, 128>}, {pipeline_mode = #tpu.pipeline_mode<synchronous>, transform_indices = @transform_2, window_bounds = array<i64: 128, 128>}, {transform_indices = @transform_3, window_bounds = array<i64: 128, 128>}, {transform_indices = @transform_4, window_bounds = array<i64: 1, 1, 128>}]} {
    %c0 = arith.constant 0 : index
    %c0_0 = arith.constant 0 : index
    %c0_1 = arith.constant 0 : index
    %0 = vector.load %arg1[%c0, %c0_0, %c0_1] : memref<1x1x128xi32, #tpu.memory_space<vmem>>, vector<1x1x128xi32>
    %1 = tpu.iota {dimensions = array<i32: 0>} : vector<128x128xi32>
    %c0_2 = arith.constant 0 : index
    %c0_3 = arith.constant 0 : index
    %c0_4 = arith.constant 0 : index
    %2 = vector.load %arg2[%c0_2, %c0_3, %c0_4] : memref<1x1x128xi32, #tpu.memory_space<vmem>>, vector<1x1x128xi32>
    %c65_i32 = arith.constant 65 : i32
    %3 = vector.broadcast %c65_i32 : i32 to vector<128x128xi32>
    %4 = arith.cmpi eq, %1, %3 : vector<128x128xi32>
    %5 = arith.extui %4 : vector<128x128xi1> to vector<128x128xi32>
    %6 = arith.sitofp %5 : vector<128x128xi32> to vector<128x128xf32>
    %7 = tpu.iota {dimensions = array<i32: 1>} : vector<1x128xi32>
    %c128_i32 = arith.constant 128 : i32
    %8 = arith.muli %arg0, %c128_i32 : i32
    %9 = vector.shape_cast %0 : vector<1x1x128xi32> to vector<1x128xi32>
    %10 = vector.shape_cast %9 : vector<1x128xi32> to vector<1x128xi32>
    %11 = vector.broadcast %10 : vector<1x128xi32> to vector<128x128xi32>
    %12 = arith.cmpi eq, %11, %1 : vector<128x128xi32>
    %13 = arith.extui %12 : vector<128x128xi1> to vector<128x128xi32>
    %14 = arith.sitofp %13 : vector<128x128xi32> to vector<128x128xf32>
    %c0_5 = arith.constant 0 : index
    %c0_6 = arith.constant 0 : index
    %15 = vector.load %arg3[%c0_5, %c0_6] : memref<128x128xf32, #tpu.memory_space<vmem>>, vector<128x128xf32>
    %cst = arith.constant dense<0.000000e+00> : vector<128x128xf32>
    %16 = tpu.matmul %15, %14, %cst {dimension_numbers = #tpu.dot_dimension_numbers<[1], [0], [0], [1], [0, 0, 1, 1], [], []>, precision = #tpu.contract_precision<fp32>} : vector<128x128xf32>, vector<128x128xf32>, vector<128x128xf32> -> vector<128x128xf32>
    %17 = tpu.transpose %16, [1, 0] : vector<128x128xf32> -> vector<128x128xf32>
    %c0_7 = arith.constant 0 : index
    %c0_8 = arith.constant 0 : index
    %18 = vector.load %arg4[%c0_7, %c0_8] : memref<128x128xf32, #tpu.memory_space<vmem>>, vector<128x128xf32>
    tpu.vector_store %arg4[%c0_7, %c0_8], %17 {strides = array<i32>} : memref<128x128xf32, #tpu.memory_space<vmem>>, vector<128x128xf32>,
    %19 = vector.shape_cast %2 : vector<1x1x128xi32> to vector<1x128xi32>
    %20 = vector.shape_cast %19 : vector<1x128xi32> to vector<1x128xi32>
    %21 = vector.broadcast %20 : vector<1x128xi32> to vector<128x128xi32>
    %22 = arith.cmpi eq, %21, %1 : vector<128x128xi32>
    %23 = arith.extui %22 : vector<128x128xi1> to vector<128x128xi32>
    %24 = arith.sitofp %23 : vector<128x128xi32> to vector<128x128xf32>
    %25 = arith.subf %6, %24 : vector<128x128xf32>
    %26 = arith.mulf %16, %25 : vector<128x128xf32>
    %cst_9 = arith.constant dense<0.000000e+00> : vector<128xf32>
    %27 = vector.multi_reduction <add>, %26, %cst_9 [0] : vector<128x128xf32> to vector<128xf32>
    %28 = vector.shape_cast %27 : vector<128xf32> to vector<1x128xf32>
    %c0_i32 = arith.constant 0 : i32
    %29 = arith.addi %8, %c0_i32 : i32
    %30 = vector.broadcast %29 : i32 to vector<1x128xi32>
    %31 = arith.addi %30, %7 : vector<1x128xi32>
    %c16_i32 = arith.constant 16 : i32
    %32 = vector.broadcast %c16_i32 : i32 to vector<1x128xi32>
    %33 = arith.cmpi slt, %31, %32 : vector<1x128xi32>
    %34 = arith.extui %33 : vector<1x128xi1> to vector<1x128xi32>
    %35 = arith.sitofp %34 : vector<1x128xi32> to vector<1x128xf32>
    %36 = arith.mulf %28, %35 : vector<1x128xf32>
    %37 = vector.shape_cast %36 : vector<1x128xf32> to vector<1x1x128xf32>
    %c0_10 = arith.constant 0 : index
    %c0_11 = arith.constant 0 : index
    %c0_12 = arith.constant 0 : index
    %38 = vector.load %arg5[%c0_10, %c0_11, %c0_12] : memref<1x1x128xf32, #tpu.memory_space<vmem>>, vector<1x1x128xf32>
    tpu.vector_store %arg5[%c0_10, %c0_11, %c0_12], %37 {strides = array<i32>} : memref<1x1x128xf32, #tpu.memory_space<vmem>>, vector<1x1x128xf32>,
    return
  }
  func.func @transform_0(%arg0: i32) -> (i32, i32, i32) {
    %c0_i32 = arith.constant 0 : i32
    %c0_i32_0 = arith.constant 0 : i32
    %c0_i32_1 = arith.constant 0 : i32
    return %arg0, %c0_i32, %c0_i32_0 : i32, i32, i32
  }
  func.func @transform_1(%arg0: i32) -> (i32, i32, i32) {
    %c0_i32 = arith.constant 0 : i32
    %c0_i32_0 = arith.constant 0 : i32
    %c0_i32_1 = arith.constant 0 : i32
    return %arg0, %c0_i32, %c0_i32_0 : i32, i32, i32
  }
  func.func @transform_2(%arg0: i32) -> (i32, i32) {
    %c0_i32 = arith.constant 0 : i32
    %c0_i32_0 = arith.constant 0 : i32
    %c0_i32_1 = arith.constant 0 : i32
    return %c0_i32, %c0_i32_0 : i32, i32
  }
  func.func @transform_3(%arg0: i32) -> (i32, i32) {
    %c0_i32 = arith.constant 0 : i32
    %c0_i32_0 = arith.constant 0 : i32
    return %arg0, %c0_i32 : i32, i32
  }
  func.func @transform_4(%arg0: i32) -> (i32, i32, i32) {
    %c0_i32 = arith.constant 0 : i32
    %c0_i32_0 = arith.constant 0 : i32
    %c0_i32_1 = arith.constant 0 : i32
    return %arg0, %c0_i32, %c0_i32_0 : i32, i32, i32
  }
}

</mosaic_0001>

<llo_original>
// kernel: tpu_custom_call.1
$region0: #{tpu_custom_call.1}
  #allocation0 [shape = 'u32[]', space=smem, size = 0x4, offset = 0x4, fixed_abs, tag = 'smem constant byte address 0x4 - core index']
  #allocation1 [shape = 'u32[72,128]{1,0:T(1,128)}', space=vmem, size = 0x9000, scoped, tag = 'internal scratch']
  %s0 = inlined_call_operand.hbm [shape: s32[1,1,128], index: 0, kind: input, shape index: {}]
  %s1 = inlined_call_operand.hbm [shape: s32[1,1,128], index: 1, kind: input, shape index: {}]
  %s2 = inlined_call_operand.hbm [shape: f32[128,128], index: 2, kind: input, shape index: {}]
  %s3 = inlined_call_operand.hbm [shape: f32[128,128], index: 3, kind: output, shape index: {0}]
  %s4 = inlined_call_operand.hbm [shape: f32[1,1,128], index: 4, kind: output, shape index: {1}]
  %5 = xla_tuple %s3, %s4
  %s6 = sld [smem:[#allocation0]]
  $region42: #{tpu_custom_call.1} parent=0
    _
  %s8 = ssub.s32 1, %s6
  %s9 = scalar_select 0, %s8, %s6
  $region1: #{tpu_custom_call.1} parent=0
    #allocation2 [shape = 'u8[512]{0}', space=vmem, size = 0x400, scoped, tag = 'input window, operand 0, single buffered']
    #allocation3 [shape = 's32[1]{0}', space=sflag, size = 0x4, scoped, tag = 'scoped memory for tpu_custom_call.1']
    #allocation4 [shape = 's32[1]{0}', space=sflag, size = 0x4, scoped, tag = 'scoped memory for tpu_custom_call.1']
    #allocation5 [shape = 'u8[512]{0}', space=vmem, size = 0x400, scoped, tag = 'input window, operand 1, single buffered']
    #allocation6 [shape = 's32[1]{0}', space=sflag, size = 0x4, scoped, tag = 'scoped memory for tpu_custom_call.1']
    #allocation7 [shape = 'u8[65536]{0}', space=vmem, size = 0x10000, scoped, tag = 'input window, operand 2, single buffered']
    #allocation8 [shape = 'u8[65536]{0}', space=vmem, size = 0x10000, scoped, tag = 'output window, operand 0, single buffered']
    #allocation9 [shape = 'u8[512]{0}', space=vmem, size = 0x400, scoped, tag = 'output window, operand 1, single buffered']
    #allocation10 [shape = 's32[1]{0}', space=sflag, size = 0x4, scoped, tag = 'scoped memory for tpu_custom_call.1']
    %10 = vsyncpa [#allocation3], 0
    %11 = vsyncpa [#allocation6], 0
    %12 = vsyncpa [#allocation4], 0
    %13 = vsyncpa [#allocation10], 0
    // Predicated region
    $region2: #{tpu_custom_call.1} parent=1 // pred_check
      _
    $region3: #{tpu_custom_call.1} parent=1 // pred_check_branch
      %15 = sbr.rel (0) target = $region5
    $region4: #{tpu_custom_call.1} parent=1 // pred_region
      %17 = vsyncadd [#allocation3], 0
      %s19 = sshll.u32 %s0, 4
      %s20 = int_to_ptr.hbm [resolvable:$true] %s19
      %s21 = sshll.u32 [#allocation2], 4
      %s22 = int_to_ptr.vmem [resolvable:$true] %s21
      %24 = dma.hbm_to_vmem [thread:$0]  %s20, 16, %s22, [#allocation3]
    $region5: #{tpu_custom_call.1} parent=1 // pred_fallthru
      _
    // Predicated region
    $region6: #{tpu_custom_call.1} parent=1 // pred_check
      _
    $region7: #{tpu_custom_call.1} parent=1 // pred_check_branch
      %26 = sbr.rel (0) target = $region9
    $region8: #{tpu_custom_call.1} parent=1 // pred_region
      %28 = vsyncadd [#allocation6], 0
      %s30 = sshll.u32 %s1, 4
      %s31 = int_to_ptr.hbm [resolvable:$true] %s30
      %s32 = sshll.u32 [#allocation5], 4
      %s33 = int_to_ptr.vmem [resolvable:$true] %s32
      %35 = dma.hbm_to_vmem [thread:$0]  %s31, 16, %s33, [#allocation6]
    $region9: #{tpu_custom_call.1} parent=1 // pred_fallthru
      _
    // Predicated region
    $region10: #{tpu_custom_call.1} parent=1 // pred_check
      _
    $region11: #{tpu_custom_call.1} parent=1 // pred_check_branch
      %37 = sbr.rel (0) target = $region13
    $region12: #{tpu_custom_call.1} parent=1 // pred_region
      %39 = vsyncadd [#allocation6], 0
      %s40 = sshll.u32 %s2, 4
      %s41 = int_to_ptr.hbm [resolvable:$true] %s40
      %s42 = sshll.u32 [#allocation7], 4
      %s43 = int_to_ptr.vmem [resolvable:$true] %s42
      %48 = dma.hbm_to_vmem [thread:$0]  %s41, 2048, %s43, [#allocation6], 128, 128, 8
    $region13: #{tpu_custom_call.1} parent=1 // pred_fallthru
      _
    // Predicated region
    $region14: #{tpu_custom_call.1} parent=1 // pred_check
      _
    $region15: #{tpu_custom_call.1} parent=1 // pred_check_branch
      %50 = sbr.rel (0) target = $region17
    $region16: #{tpu_custom_call.1} parent=1 // pred_region
      %52 = dma.done [#allocation3], 16
    $region17: #{tpu_custom_call.1} parent=1 // pred_fallthru
      _
    // Predicated region
    $region18: #{tpu_custom_call.1} parent=1 // pred_check
      _
    $region19: #{tpu_custom_call.1} parent=1 // pred_check_branch
      %54 = sbr.rel (0) target = $region21
    $region20: #{tpu_custom_call.1} parent=1 // pred_region
      %56 = dma.done [#allocation6], 16
    $region21: #{tpu_custom_call.1} parent=1 // pred_fallthru
      _
    // Predicated region
    $region22: #{tpu_custom_call.1} parent=1 // pred_check
      _
    $region23: #{tpu_custom_call.1} parent=1 // pred_check_branch
      %58 = sbr.rel (0) target = $region25
    $region24: #{tpu_custom_call.1} parent=1 // pred_region
      %60 = dma.done [#allocation6], 2048
    $region25: #{tpu_custom_call.1} parent=1 // pred_fallthru
      _
    %v61 = vld [vmem:[#allocation2] sm:$0x1]
    %v62 = vlaneseq
    %v63 = vshrl.u32 %v62, 7
    %v64 = vadd.s32 %v63, 8
    %v65 = vadd.s32 %v63, 16
    %v66 = vadd.s32 %v63, 24
    %v67 = vadd.s32 %v63, 32
    %v68 = vadd.s32 %v63, 40
    %v69 = vadd.s32 %v63, 48
    %v70 = vadd.s32 %v63, 56
    %v71 = vadd.s32 %v63, 64
    %v72 = vadd.s32 %v63, 72
    %v73 = vadd.s32 %v63, 80
    %v74 = vadd.s32 %v63, 88
    %v75 = vadd.s32 %v63, 96
    %v76 = vadd.s32 %v63, 104
    %v77 = vadd.s32 %v63, 112
    %v78 = vadd.s32 %v63, 120
    %v79 = vld [vmem:[#allocation5] sm:$0x1]
    %vm80 = vcmp.eq.s32.totalorder %v63, 65
    %vm81 = vcmp.eq.s32.totalorder %v64, 65
    %vm82 = vcmp.eq.s32.totalorder %v65, 65
    %vm83 = vcmp.eq.s32.totalorder %v66, 65
    %vm84 = vcmp.eq.s32.totalorder %v67, 65
    %vm85 = vcmp.eq.s32.totalorder %v68, 65
    %vm86 = vcmp.eq.s32.totalorder %v69, 65
    %vm87 = vcmp.eq.s32.totalorder %v70, 65
    %vm88 = vcmp.eq.s32.totalorder %v71, 65
    %vm89 = vcmp.eq.s32.totalorder %v72, 65
    %vm90 = vcmp.eq.s32.totalorder %v73, 65
    %vm91 = vcmp.eq.s32.totalorder %v74, 65
    %vm92 = vcmp.eq.s32.totalorder %v75, 65
    %vm93 = vcmp.eq.s32.totalorder %v76, 65
    %vm94 = vcmp.eq.s32.totalorder %v77, 65
    %vm95 = vcmp.eq.s32.totalorder %v78, 65
    %v96 = vsel %vm80, 1, 0
    %v97 = vsel %vm81, 1, 0
    %v98 = vsel %vm82, 1, 0
    %v99 = vsel %vm83, 1, 0
    %v100 = vsel %vm84, 1, 0
    %v101 = vsel %vm85, 1, 0
    %v102 = vsel %vm86, 1, 0
    %v103 = vsel %vm87, 1, 0
    %v104 = vsel %vm88, 1, 0
    %v105 = vsel %vm89, 1, 0
    %v106 = vsel %vm90, 1, 0
    %v107 = vsel %vm91, 1, 0
    %v108 = vsel %vm92, 1, 0
    %v109 = vsel %vm93, 1, 0
    %v110 = vsel %vm94, 1, 0
    %v111 = vsel %vm95, 1, 0
    %v112 = vcvt.s32.f32 %v96
    %v113 = vcvt.s32.f32 %v97
    %v114 = vcvt.s32.f32 %v98
    %v115 = vcvt.s32.f32 %v99
    %v116 = vcvt.s32.f32 %v100
    %v117 = vcvt.s32.f32 %v101
    %v118 = vcvt.s32.f32 %v102
    %v119 = vcvt.s32.f32 %v103
    %v120 = vcvt.s32.f32 %v104
    %v121 = vcvt.s32.f32 %v105
    %v122 = vcvt.s32.f32 %v106
    %v123 = vcvt.s32.f32 %v107
    %v124 = vcvt.s32.f32 %v108
    %v125 = vcvt.s32.f32 %v109
    %v126 = vcvt.s32.f32 %v110
    %v127 = vcvt.s32.f32 %v111
    %v128 = vlaneseq
    %v129 = vand.u32 %v128, 127
    %s130 = smul.u32 0, 128
    %v131 = vperm.slane %v61, 0
    %vm132 = vcmp.eq.s32.totalorder %v131, %v63
    %vm133 = vcmp.eq.s32.totalorder %v131, %v64
    %vm134 = vcmp.eq.s32.totalorder %v131, %v65
    %vm135 = vcmp.eq.s32.totalorder %v131, %v66
    %vm136 = vcmp.eq.s32.totalorder %v131, %v67
    %vm137 = vcmp.eq.s32.totalorder %v131, %v68
    %vm138 = vcmp.eq.s32.totalorder %v131, %v69
    %vm139 = vcmp.eq.s32.totalorder %v131, %v70
    %vm140 = vcmp.eq.s32.totalorder %v131, %v71
    %vm141 = vcmp.eq.s32.totalorder %v131, %v72
    %vm142 = vcmp.eq.s32.totalorder %v131, %v73
    %vm143 = vcmp.eq.s32.totalorder %v131, %v74
    %vm144 = vcmp.eq.s32.totalorder %v131, %v75
    %vm145 = vcmp.eq.s32.totalorder %v131, %v76
    %vm146 = vcmp.eq.s32.totalorder %v131, %v77
    %vm147 = vcmp.eq.s32.totalorder %v131, %v78
    %v148 = vsel %vm132, 1, 0
    %v149 = vsel %vm133, 1, 0
    %v150 = vsel %vm134, 1, 0
    %v151 = vsel %vm135, 1, 0
    %v152 = vsel %vm136, 1, 0
    %v153 = vsel %vm137, 1, 0
    %v154 = vsel %vm138, 1, 0
    %v155 = vsel %vm139, 1, 0
    %v156 = vsel %vm140, 1, 0
    %v157 = vsel %vm141, 1, 0
    %v158 = vsel %vm142, 1, 0
    %v159 = vsel %vm143, 1, 0
    %v160 = vsel %vm144, 1, 0
    %v161 = vsel %vm145, 1, 0
    %v162 = vsel %vm146, 1, 0
    %v163 = vsel %vm147, 1, 0
    %v164 = vcvt.s32.f32 %v148
    %v165 = vcvt.s32.f32 %v149
    %v166 = vcvt.s32.f32 %v150
    %v167 = vcvt.s32.f32 %v151
    %v168 = vcvt.s32.f32 %v152
    %v169 = vcvt.s32.f32 %v153
    %v170 = vcvt.s32.f32 %v154
    %v171 = vcvt.s32.f32 %v155
    %v172 = vcvt.s32.f32 %v156
    %v173 = vcvt.s32.f32 %v157
    %v174 = vcvt.s32.f32 %v158
    %v175 = vcvt.s32.f32 %v159
    %v176 = vcvt.s32.f32 %v160
    %v177 = vcvt.s32.f32 %v161
    %v178 = vcvt.s32.f32 %v162
    %v179 = vcvt.s32.f32 %v163
    %v180 = vld [vmem:[#allocation7] sm:$0xff]
    %v181 = vld [vmem:[#allocation7 + $0x8] sm:$0xff]
    %v182 = vld [vmem:[#allocation7 + $0x10] sm:$0xff]
    %v183 = vld [vmem:[#allocation7 + $0x18] sm:$0xff]
    %v184 = vld [vmem:[#allocation7 + $0x20] sm:$0xff]
    %v185 = vld [vmem:[#allocation7 + $0x28] sm:$0xff]
    %v186 = vld [vmem:[#allocation7 + $0x30] sm:$0xff]
    %v187 = vld [vmem:[#allocation7 + $0x38] sm:$0xff]
    %v188 = vld [vmem:[#allocation7 + $0x40] sm:$0xff]
    %v189 = vld [vmem:[#allocation7 + $0x48] sm:$0xff]
    %v190 = vld [vmem:[#allocation7 + $0x50] sm:$0xff]
    %v191 = vld [vmem:[#allocation7 + $0x58] sm:$0xff]
    %v192 = vld [vmem:[#allocation7 + $0x60] sm:$0xff]
    %v193 = vld [vmem:[#allocation7 + $0x68] sm:$0xff]
    %v194 = vld [vmem:[#allocation7 + $0x70] sm:$0xff]
    %v195 = vld [vmem:[#allocation7 + $0x78] sm:$0xff]
    %v196 = vand.u32 %v179, 4294901760
    %197 = vmatpush.msra.mxu0 %v196
    %v198 = vand.u32 %v178, 4294901760
    %199 = vmatpush.msra.mxu0 %v198
    %v200 = vand.u32 %v177, 4294901760
    %201 = vmatpush.msra.mxu0 %v200
    %v202 = vand.u32 %v176, 4294901760
    %203 = vmatpush.msra.mxu0 %v202
    %v204 = vand.u32 %v175, 4294901760
    %205 = vmatpush.msra.mxu0 %v204
    %v206 = vand.u32 %v174, 4294901760
    %207 = vmatpush.msra.mxu0 %v206
    %v208 = vand.u32 %v173, 4294901760
    %209 = vmatpush.msra.mxu0 %v208
    %v210 = vand.u32 %v172, 4294901760
    %211 = vmatpush.msra.mxu0 %v210
    %v212 = vand.u32 %v171, 4294901760
    %213 = vmatpush.msra.mxu0 %v212
    %v214 = vand.u32 %v170, 4294901760
    %215 = vmatpush.msra.mxu0 %v214
    %v216 = vand.u32 %v169, 4294901760
    %217 = vmatpush.msra.mxu0 %v216
    %v218 = vand.u32 %v168, 4294901760
    %219 = vmatpush.msra.mxu0 %v218
    %v220 = vand.u32 %v167, 4294901760
    %221 = vmatpush.msra.mxu0 %v220
    %v222 = vand.u32 %v166, 4294901760
    %223 = vmatpush.msra.mxu0 %v222
    %v224 = vand.u32 %v165, 4294901760
    %225 = vmatpush.msra.mxu0 %v224
    %v226 = vand.u32 %v164, 4294901760
    %227 = vmatpush.msra.mxu0 %v226
    %v228 = vand.u32 %v180, 4294901760
    %v229 = vsub.f32 %v180, %v228
    %v230 = vand.u32 %v229, 4294901760
    %v231 = vsub.f32 %v229, %v230
    %v232 = vand.u32 %v231, 4294901760
    %233 = vmatmul.f32.gmra.mxu0 %v232
    %v234 = vpop.f32.mrf.mxu0
    %v235 = vadd.f32 0.0, %v234
    %v236 = vand.u32 %v181, 4294901760
    %v237 = vsub.f32 %v181, %v236
    %v238 = vand.u32 %v237, 4294901760
    %v239 = vsub.f32 %v237, %v238
    %v240 = vand.u32 %v239, 4294901760
    %241 = vmatmul.f32.gmra.mxu0 %v240
    %v242 = vpop.f32.mrf.mxu0
    %v243 = vadd.f32 0.0, %v242
    %v244 = vand.u32 %v182, 4294901760
    %v245 = vsub.f32 %v182, %v244
    %v246 = vand.u32 %v245, 4294901760
    %v247 = vsub.f32 %v245, %v246
    %v248 = vand.u32 %v247, 4294901760
    %249 = vmatmul.f32.gmra.mxu0 %v248
    %v250 = vpop.f32.mrf.mxu0
    %v251 = vadd.f32 0.0, %v250
    %v252 = vand.u32 %v183, 4294901760
    %v253 = vsub.f32 %v183, %v252
    %v254 = vand.u32 %v253, 4294901760
    %v255 = vsub.f32 %v253, %v254
    %v256 = vand.u32 %v255, 4294901760
    %257 = vmatmul.f32.gmra.mxu0 %v256
    %v258 = vpop.f32.mrf.mxu0
    %v259 = vadd.f32 0.0, %v258
    %v260 = vand.u32 %v184, 4294901760
    %v261 = vsub.f32 %v184, %v260
    %v262 = vand.u32 %v261, 4294901760
    %v263 = vsub.f32 %v261, %v262
    %v264 = vand.u32 %v263, 4294901760
    %265 = vmatmul.f32.gmra.mxu0 %v264
    %v266 = vpop.f32.mrf.mxu0
    %v267 = vadd.f32 0.0, %v266
    %v268 = vand.u32 %v185, 4294901760
    %v269 = vsub.f32 %v185, %v268
    %v270 = vand.u32 %v269, 4294901760
    %v271 = vsub.f32 %v269, %v270
    %v272 = vand.u32 %v271, 4294901760
    %273 = vmatmul.f32.gmra.mxu0 %v272
    %v274 = vpop.f32.mrf.mxu0
    %v275 = vadd.f32 0.0, %v274
    %v276 = vand.u32 %v186, 4294901760
    %v277 = vsub.f32 %v186, %v276
    %v278 = vand.u32 %v277, 4294901760
    %v279 = vsub.f32 %v277, %v278
    %v280 = vand.u32 %v279, 4294901760
    %281 = vmatmul.f32.gmra.mxu0 %v280
    %v282 = vpop.f32.mrf.mxu0
    %v283 = vadd.f32 0.0, %v282
    %v284 = vand.u32 %v187, 4294901760
    %v285 = vsub.f32 %v187, %v284
    %v286 = vand.u32 %v285, 4294901760
    %v287 = vsub.f32 %v285, %v286
    %v288 = vand.u32 %v287, 4294901760
    %289 = vmatmul.f32.gmra.mxu0 %v288
    %v290 = vpop.f32.mrf.mxu0
    %v291 = vadd.f32 0.0, %v290
    %v292 = vand.u32 %v188, 4294901760
    %v293 = vsub.f32 %v188, %v292
    %v294 = vand.u32 %v293, 4294901760
    %v295 = vsub.f32 %v293, %v294
    %v296 = vand.u32 %v295, 4294901760
    %297 = vmatmul.f32.gmra.mxu0 %v296
    %v298 = vpop.f32.mrf.mxu0
    %v299 = vadd.f32 0.0, %v298
    %v300 = vand.u32 %v189, 4294901760
    %v301 = vsub.f32 %v189, %v300
    %v302 = vand.u32 %v301, 4294901760
    %v303 = vsub.f32 %v301, %v302
    %v304 = vand.u32 %v303, 4294901760
    %305 = vmatmul.f32.gmra.mxu0 %v304
    %v306 = vpop.f32.mrf.mxu0
    %v307 = vadd.f32 0.0, %v306
    %v308 = vand.u32 %v190, 4294901760
    %v309 = vsub.f32 %v190, %v308
    %v310 = vand.u32 %v309, 4294901760
    %v311 = vsub.f32 %v309, %v310
    %v312 = vand.u32 %v311, 4294901760
    %313 = vmatmul.f32.gmra.mxu0 %v312
    %v314 = vpop.f32.mrf.mxu0
    %v315 = vadd.f32 0.0, %v314
    %v316 = vand.u32 %v191, 4294901760
    %v317 = vsub.f32 %v191, %v316
    %v318 = vand.u32 %v317, 4294901760
    %v319 = vsub.f32 %v317, %v318
    %v320 = vand.u32 %v319, 4294901760
    %321 = vmatmul.f32.gmra.mxu0 %v320
    %v322 = vpop.f32.mrf.mxu0
    %v323 = vadd.f32 0.0, %v322
    %v324 = vand.u32 %v192, 4294901760
    %v325 = vsub.f32 %v192, %v324
    %v326 = vand.u32 %v325, 4294901760
    %v327 = vsub.f32 %v325, %v326
    %v328 = vand.u32 %v327, 4294901760
    %329 = vmatmul.f32.gmra.mxu0 %v328
    %v330 = vpop.f32.mrf.mxu0
    %v331 = vadd.f32 0.0, %v330
    %v332 = vand.u32 %v193, 4294901760
    %v333 = vsub.f32 %v193, %v332
    %v334 = vand.u32 %v333, 4294901760
    %v335 = vsub.f32 %v333, %v334
    %v336 = vand.u32 %v335, 4294901760
    %337 = vmatmul.f32.gmra.mxu0 %v336
    %v338 = vpop.f32.mrf.mxu0
    %v339 = vadd.f32 0.0, %v338
    %v340 = vand.u32 %v194, 4294901760
    %v341 = vsub.f32 %v194, %v340
    %v342 = vand.u32 %v341, 4294901760
    %v343 = vsub.f32 %v341, %v342
    %v344 = vand.u32 %v343, 4294901760
    %345 = vmatmul.f32.gmra.mxu0 %v344
    %v346 = vpop.f32.mrf.mxu0
    %v347 = vadd.f32 0.0, %v346
    %v348 = vand.u32 %v195, 4294901760
    %v349 = vsub.f32 %v195, %v348
    %v350 = vand.u32 %v349, 4294901760
    %v351 = vsub.f32 %v349, %v350
    %v352 = vand.u32 %v351, 4294901760
    %353 = vmatmul.f32.gmra.mxu0 %v352
    %v354 = vpop.f32.mrf.mxu0
    %v355 = vadd.f32 0.0, %v354
    %356 = vdwg.mxu0
    %v357 = vand.u32 %v179, 4294901760
    %v358 = vsub.f32 %v179, %v357
    %v359 = vand.u32 %v358, 4294901760
    %v360 = vsub.f32 %v358, %v359
    %v361 = vand.u32 %v360, 4294901760
    %362 = vmatpush.msra.mxu0 %v361
    %v363 = vand.u32 %v178, 4294901760
    %v364 = vsub.f32 %v178, %v363
    %v365 = vand.u32 %v364, 4294901760
    %v366 = vsub.f32 %v364, %v365
    %v367 = vand.u32 %v366, 4294901760
    %368 = vmatpush.msra.mxu0 %v367
    %v369 = vand.u32 %v177, 4294901760
    %v370 = vsub.f32 %v177, %v369
    %v371 = vand.u32 %v370, 4294901760
    %v372 = vsub.f32 %v370, %v371
    %v373 = vand.u32 %v372, 4294901760
    %374 = vmatpush.msra.mxu0 %v373
    %v375 = vand.u32 %v176, 4294901760
    %v376 = vsub.f32 %v176, %v375
    %v377 = vand.u32 %v376, 4294901760
    %v378 = vsub.f32 %v376, %v377
    %v379 = vand.u32 %v378, 4294901760
    %380 = vmatpush.msra.mxu0 %v379
    %v381 = vand.u32 %v175, 4294901760
    %v382 = vsub.f32 %v175, %v381
    %v383 = vand.u32 %v382, 4294901760
    %v384 = vsub.f32 %v382, %v383
    %v385 = vand.u32 %v384, 4294901760
    %386 = vmatpush.msra.mxu0 %v385
    %v387 = vand.u32 %v174, 4294901760
    %v388 = vsub.f32 %v174, %v387
    %v389 = vand.u32 %v388, 4294901760
    %v390 = vsub.f32 %v388, %v389
    %v391 = vand.u32 %v390, 4294901760
    %392 = vmatpush.msra.mxu0 %v391
    %v393 = vand.u32 %v173, 4294901760
    %v394 = vsub.f32 %v173, %v393
    %v395 = vand.u32 %v394, 4294901760
    %v396 = vsub.f32 %v394, %v395
    %v397 = vand.u32 %v396, 4294901760
    %398 = vmatpush.msra.mxu0 %v397
    %v399 = vand.u32 %v172, 4294901760
    %v400 = vsub.f32 %v172, %v399
    %v401 = vand.u32 %v400, 4294901760
    %v402 = vsub.f32 %v400, %v401
    %v403 = vand.u32 %v402, 4294901760
    %404 = vmatpush.msra.mxu0 %v403
    %v405 = vand.u32 %v171, 4294901760
    %v406 = vsub.f32 %v171, %v405
    %v407 = vand.u32 %v406, 4294901760
    %v408 = vsub.f32 %v406, %v407
    %v409 = vand.u32 %v408, 4294901760
    %410 = vmatpush.msra.mxu0 %v409
    %v411 = vand.u32 %v170, 4294901760
    %v412 = vsub.f32 %v170, %v411
    %v413 = vand.u32 %v412, 4294901760
    %v414 = vsub.f32 %v412, %v413
    %v415 = vand.u32 %v414, 4294901760
    %416 = vmatpush.msra.mxu0 %v415
    %v417 = vand.u32 %v169, 4294901760
    %v418 = vsub.f32 %v169, %v417
    %v419 = vand.u32 %v418, 4294901760
    %v420 = vsub.f32 %v418, %v419
    %v421 = vand.u32 %v420, 4294901760
    %422 = vmatpush.msra.mxu0 %v421
    %v423 = vand.u32 %v168, 4294901760
    %v424 = vsub.f32 %v168, %v423
    %v425 = vand.u32 %v424, 4294901760
    %v426 = vsub.f32 %v424, %v425
    %v427 = vand.u32 %v426, 4294901760
    %428 = vmatpush.msra.mxu0 %v427
    %v429 = vand.u32 %v167, 4294901760
    %v430 = vsub.f32 %v167, %v429
    %v431 = vand.u32 %v430, 4294901760
    %v432 = vsub.f32 %v430, %v431
    %v433 = vand.u32 %v432, 4294901760
    %434 = vmatpush.msra.mxu0 %v433
    %v435 = vand.u32 %v166, 4294901760
    %v436 = vsub.f32 %v166, %v435
    %v437 = vand.u32 %v436, 4294901760
    %v438 = vsub.f32 %v436, %v437
    %v439 = vand.u32 %v438, 4294901760
    %440 = vmatpush.msra.mxu0 %v439
    %v441 = vand.u32 %v165, 4294901760
    %v442 = vsub.f32 %v165, %v441
    %v443 = vand.u32 %v442, 4294901760
    %v444 = vsub.f32 %v442, %v443
    %v445 = vand.u32 %v444, 4294901760
    %446 = vmatpush.msra.mxu0 %v445
    %v447 = vand.u32 %v164, 4294901760
    %v448 = vsub.f32 %v164, %v447
    %v449 = vand.u32 %v448, 4294901760
    %v450 = vsub.f32 %v448, %v449
    %v451 = vand.u32 %v450, 4294901760
    %452 = vmatpush.msra.mxu0 %v451
    %v453 = vand.u32 %v180, 4294901760
    %454 = vmatmul.f32.gmra.mxu0 %v453
    %v455 = vpop.f32.mrf.mxu0
    %v456 = vadd.f32 %v235, %v455
    %v457 = vand.u32 %v181, 4294901760
    %458 = vmatmul.f32.gmra.mxu0 %v457
    %v459 = vpop.f32.mrf.mxu0
    %v460 = vadd.f32 %v243, %v459
    %v461 = vand.u32 %v182, 4294901760
    %462 = vmatmul.f32.gmra.mxu0 %v461
    %v463 = vpop.f32.mrf.mxu0
    %v464 = vadd.f32 %v251, %v463
    %v465 = vand.u32 %v183, 4294901760
    %466 = vmatmul.f32.gmra.mxu0 %v465
    %v467 = vpop.f32.mrf.mxu0
    %v468 = vadd.f32 %v259, %v467
    %v469 = vand.u32 %v184, 4294901760
    %470 = vmatmul.f32.gmra.mxu0 %v469
    %v471 = vpop.f32.mrf.mxu0
    %v472 = vadd.f32 %v267, %v471
    %v473 = vand.u32 %v185, 4294901760
    %474 = vmatmul.f32.gmra.mxu0 %v473
    %v475 = vpop.f32.mrf.mxu0
    %v476 = vadd.f32 %v275, %v475
    %v477 = vand.u32 %v186, 4294901760
    %478 = vmatmul.f32.gmra.mxu0 %v477
    %v479 = vpop.f32.mrf.mxu0
    %v480 = vadd.f32 %v283, %v479
    %v481 = vand.u32 %v187, 4294901760
    %482 = vmatmul.f32.gmra.mxu0 %v481
    %v483 = vpop.f32.mrf.mxu0
    %v484 = vadd.f32 %v291, %v483
    %v485 = vand.u32 %v188, 4294901760
    %486 = vmatmul.f32.gmra.mxu0 %v485
    %v487 = vpop.f32.mrf.mxu0
    %v488 = vadd.f32 %v299, %v487
    %v489 = vand.u32 %v189, 4294901760
    %490 = vmatmul.f32.gmra.mxu0 %v489
    %v491 = vpop.f32.mrf.mxu0
    %v492 = vadd.f32 %v307, %v491
    %v493 = vand.u32 %v190, 4294901760
    %494 = vmatmul.f32.gmra.mxu0 %v493
    %v495 = vpop.f32.mrf.mxu0
    %v496 = vadd.f32 %v315, %v495
    %v497 = vand.u32 %v191, 4294901760
    %498 = vmatmul.f32.gmra.mxu0 %v497
    %v499 = vpop.f32.mrf.mxu0
    %v500 = vadd.f32 %v323, %v499
    %v501 = vand.u32 %v192, 4294901760
    %502 = vmatmul.f32.gmra.mxu0 %v501
    %v503 = vpop.f32.mrf.mxu0
    %v504 = vadd.f32 %v331, %v503
    %v505 = vand.u32 %v193, 4294901760
    %506 = vmatmul.f32.gmra.mxu0 %v505
    %v507 = vpop.f32.mrf.mxu0
    %v508 = vadd.f32 %v339, %v507
    %v509 = vand.u32 %v194, 4294901760
    %510 = vmatmul.f32.gmra.mxu0 %v509
    %v511 = vpop.f32.mrf.mxu0
    %v512 = vadd.f32 %v347, %v511
    %v513 = vand.u32 %v195, 4294901760
    %514 = vmatmul.f32.gmra.mxu0 %v513
    %v515 = vpop.f32.mrf.mxu0
    %v516 = vadd.f32 %v355, %v515
    %517 = vdwg.mxu0
    %v518 = vand.u32 %v179, 4294901760
    %v519 = vsub.f32 %v179, %v518
    %520 = vmatpush.msra.mxu0 %v519
    %v521 = vand.u32 %v178, 4294901760
    %v522 = vsub.f32 %v178, %v521
    %523 = vmatpush.msra.mxu0 %v522
    %v524 = vand.u32 %v177, 4294901760
    %v525 = vsub.f32 %v177, %v524
    %526 = vmatpush.msra.mxu0 %v525
    %v527 = vand.u32 %v176, 4294901760
    %v528 = vsub.f32 %v176, %v527
    %529 = vmatpush.msra.mxu0 %v528
    %v530 = vand.u32 %v175, 4294901760
    %v531 = vsub.f32 %v175, %v530
    %532 = vmatpush.msra.mxu0 %v531
    %v533 = vand.u32 %v174, 4294901760
    %v534 = vsub.f32 %v174, %v533
    %535 = vmatpush.msra.mxu0 %v534
    %v536 = vand.u32 %v173, 4294901760
    %v537 = vsub.f32 %v173, %v536
    %538 = vmatpush.msra.mxu0 %v537
    %v539 = vand.u32 %v172, 4294901760
    %v540 = vsub.f32 %v172, %v539
    %541 = vmatpush.msra.mxu0 %v540
    %v542 = vand.u32 %v171, 4294901760
    %v543 = vsub.f32 %v171, %v542
    %544 = vmatpush.msra.mxu0 %v543
    %v545 = vand.u32 %v170, 4294901760
    %v546 = vsub.f32 %v170, %v545
    %547 = vmatpush.msra.mxu0 %v546
    %v548 = vand.u32 %v169, 4294901760
    %v549 = vsub.f32 %v169, %v548
    %550 = vmatpush.msra.mxu0 %v549
    %v551 = vand.u32 %v168, 4294901760
    %v552 = vsub.f32 %v168, %v551
    %553 = vmatpush.msra.mxu0 %v552
    %v554 = vand.u32 %v167, 4294901760
    %v555 = vsub.f32 %v167, %v554
    %556 = vmatpush.msra.mxu0 %v555
    %v557 = vand.u32 %v166, 4294901760
    %v558 = vsub.f32 %v166, %v557
    %559 = vmatpush.msra.mxu0 %v558
    %v560 = vand.u32 %v165, 4294901760
    %v561 = vsub.f32 %v165, %v560
    %562 = vmatpush.msra.mxu0 %v561
    %v563 = vand.u32 %v164, 4294901760
    %v564 = vsub.f32 %v164, %v563
    %565 = vmatpush.msra.mxu0 %v564
    %v566 = vand.u32 %v180, 4294901760
    %v567 = vsub.f32 %v180, %v566
    %568 = vmatmul.f32.gmra.mxu0 %v567
    %v569 = vpop.f32.mrf.mxu0
    %v570 = vadd.f32 %v456, %v569
    %v571 = vand.u32 %v181, 4294901760
    %v572 = vsub.f32 %v181, %v571
    %573 = vmatmul.f32.gmra.mxu0 %v572
    %v574 = vpop.f32.mrf.mxu0
    %v575 = vadd.f32 %v460, %v574
    %v576 = vand.u32 %v182, 4294901760
    %v577 = vsub.f32 %v182, %v576
    %578 = vmatmul.f32.gmra.mxu0 %v577
    %v579 = vpop.f32.mrf.mxu0
    %v580 = vadd.f32 %v464, %v579
    %v581 = vand.u32 %v183, 4294901760
    %v582 = vsub.f32 %v183, %v581
    %583 = vmatmul.f32.gmra.mxu0 %v582
    %v584 = vpop.f32.mrf.mxu0
    %v585 = vadd.f32 %v468, %v584
    %v586 = vand.u32 %v184, 4294901760
    %v587 = vsub.f32 %v184, %v586
    %588 = vmatmul.f32.gmra.mxu0 %v587
    %v589 = vpop.f32.mrf.mxu0
    %v590 = vadd.f32 %v472, %v589
    %v591 = vand.u32 %v185, 4294901760
    %v592 = vsub.f32 %v185, %v591
    %593 = vmatmul.f32.gmra.mxu0 %v592
    %v594 = vpop.f32.mrf.mxu0
    %v595 = vadd.f32 %v476, %v594
    %v596 = vand.u32 %v186, 4294901760
    %v597 = vsub.f32 %v186, %v596
    %598 = vmatmul.f32.gmra.mxu0 %v597
    %v599 = vpop.f32.mrf.mxu0
    %v600 = vadd.f32 %v480, %v599
    %v601 = vand.u32 %v187, 4294901760
    %v602 = vsub.f32 %v187, %v601
    %603 = vmatmul.f32.gmra.mxu0 %v602
    %v604 = vpop.f32.mrf.mxu0
    %v605 = vadd.f32 %v484, %v604
    %v606 = vand.u32 %v188, 4294901760
    %v607 = vsub.f32 %v188, %v606
    %608 = vmatmul.f32.gmra.mxu0 %v607
    %v609 = vpop.f32.mrf.mxu0
    %v610 = vadd.f32 %v488, %v609
    %v611 = vand.u32 %v189, 4294901760
    %v612 = vsub.f32 %v189, %v611
    %613 = vmatmul.f32.gmra.mxu0 %v612
    %v614 = vpop.f32.mrf.mxu0
    %v615 = vadd.f32 %v492, %v614
    %v616 = vand.u32 %v190, 4294901760
    %v617 = vsub.f32 %v190, %v616
    %618 = vmatmul.f32.gmra.mxu0 %v617
    %v619 = vpop.f32.mrf.mxu0
    %v620 = vadd.f32 %v496, %v619
    %v621 = vand.u32 %v191, 4294901760
    %v622 = vsub.f32 %v191, %v621
    %623 = vmatmul.f32.gmra.mxu0 %v622
    %v624 = vpop.f32.mrf.mxu0
    %v625 = vadd.f32 %v500, %v624
    %v626 = vand.u32 %v192, 4294901760
    %v627 = vsub.f32 %v192, %v626
    %628 = vmatmul.f32.gmra.mxu0 %v627
    %v629 = vpop.f32.mrf.mxu0
    %v630 = vadd.f32 %v504, %v629
    %v631 = vand.u32 %v193, 4294901760
    %v632 = vsub.f32 %v193, %v631
    %633 = vmatmul.f32.gmra.mxu0 %v632
    %v634 = vpop.f32.mrf.mxu0
    %v635 = vadd.f32 %v508, %v634
    %v636 = vand.u32 %v194, 4294901760
    %v637 = vsub.f32 %v194, %v636
    %638 = vmatmul.f32.gmra.mxu0 %v637
    %v639 = vpop.f32.mrf.mxu0
    %v640 = vadd.f32 %v512, %v639
    %v641 = vand.u32 %v195, 4294901760
    %v642 = vsub.f32 %v195, %v641
    %643 = vmatmul.f32.gmra.mxu0 %v642
    %v644 = vpop.f32.mrf.mxu0
    %v645 = vadd.f32 %v516, %v644
    %646 = vdwg.mxu0
    %v647 = vand.u32 %v179, 4294901760
    %648 = vmatpush.msra.mxu0 %v647
    %v649 = vand.u32 %v178, 4294901760
    %650 = vmatpush.msra.mxu0 %v649
    %v651 = vand.u32 %v177, 4294901760
    %652 = vmatpush.msra.mxu0 %v651
    %v653 = vand.u32 %v176, 4294901760
    %654 = vmatpush.msra.mxu0 %v653
    %v655 = vand.u32 %v175, 4294901760
    %656 = vmatpush.msra.mxu0 %v655
    %v657 = vand.u32 %v174, 4294901760
    %658 = vmatpush.msra.mxu0 %v657
    %v659 = vand.u32 %v173, 4294901760
    %660 = vmatpush.msra.mxu0 %v659
    %v661 = vand.u32 %v172, 4294901760
    %662 = vmatpush.msra.mxu0 %v661
    %v663 = vand.u32 %v171, 4294901760
    %664 = vmatpush.msra.mxu0 %v663
    %v665 = vand.u32 %v170, 4294901760
    %666 = vmatpush.msra.mxu0 %v665
    %v667 = vand.u32 %v169, 4294901760
    %668 = vmatpush.msra.mxu0 %v667
    %v669 = vand.u32 %v168, 4294901760
    %670 = vmatpush.msra.mxu0 %v669
    %v671 = vand.u32 %v167, 4294901760
    %672 = vmatpush.msra.mxu0 %v671
    %v673 = vand.u32 %v166, 4294901760
    %674 = vmatpush.msra.mxu0 %v673
    %v675 = vand.u32 %v165, 4294901760
    %676 = vmatpush.msra.mxu0 %v675
    %v677 = vand.u32 %v164, 4294901760
    %678 = vmatpush.msra.mxu0 %v677
    %v679 = vand.u32 %v180, 4294901760
    %v680 = vsub.f32 %v180, %v679
    %v681 = vand.u32 %v680, 4294901760
    %682 = vmatmul.f32.gmra.mxu0 %v681
    %v683 = vpop.f32.mrf.mxu0
    %v684 = vadd.f32 %v570, %v683
    %v685 = vand.u32 %v181, 4294901760
    %v686 = vsub.f32 %v181, %v685
    %v687 = vand.u32 %v686, 4294901760
    %688 = vmatmul.f32.gmra.mxu0 %v687
    %v689 = vpop.f32.mrf.mxu0
    %v690 = vadd.f32 %v575, %v689
    %v691 = vand.u32 %v182, 4294901760
    %v692 = vsub.f32 %v182, %v691
    %v693 = vand.u32 %v692, 4294901760
    %694 = vmatmul.f32.gmra.mxu0 %v693
    %v695 = vpop.f32.mrf.mxu0
    %v696 = vadd.f32 %v580, %v695
    %v697 = vand.u32 %v183, 4294901760
    %v698 = vsub.f32 %v183, %v697
    %v699 = vand.u32 %v698, 4294901760
    %700 = vmatmul.f32.gmra.mxu0 %v699
    %v701 = vpop.f32.mrf.mxu0
    %v702 = vadd.f32 %v585, %v701
    %v703 = vand.u32 %v184, 4294901760
    %v704 = vsub.f32 %v184, %v703
    %v705 = vand.u32 %v704, 4294901760
    %706 = vmatmul.f32.gmra.mxu0 %v705
    %v707 = vpop.f32.mrf.mxu0
    %v708 = vadd.f32 %v590, %v707
    %v709 = vand.u32 %v185, 4294901760
    %v710 = vsub.f32 %v185, %v709
    %v711 = vand.u32 %v710, 4294901760
    %712 = vmatmul.f32.gmra.mxu0 %v711
    %v713 = vpop.f32.mrf.mxu0
    %v714 = vadd.f32 %v595, %v713
    %v715 = vand.u32 %v186, 4294901760
    %v716 = vsub.f32 %v186, %v715
    %v717 = vand.u32 %v716, 4294901760
    %718 = vmatmul.f32.gmra.mxu0 %v717
    %v719 = vpop.f32.mrf.mxu0
    %v720 = vadd.f32 %v600, %v719
    %v721 = vand.u32 %v187, 4294901760
    %v722 = vsub.f32 %v187, %v721
    %v723 = vand.u32 %v722, 4294901760
    %724 = vmatmul.f32.gmra.mxu0 %v723
    %v725 = vpop.f32.mrf.mxu0
    %v726 = vadd.f32 %v605, %v725
    %v727 = vand.u32 %v188, 4294901760
    %v728 = vsub.f32 %v188, %v727
    %v729 = vand.u32 %v728, 4294901760
    %730 = vmatmul.f32.gmra.mxu0 %v729
    %v731 = vpop.f32.mrf.mxu0
    %v732 = vadd.f32 %v610, %v731
    %v733 = vand.u32 %v189, 4294901760
    %v734 = vsub.f32 %v189, %v733
    %v735 = vand.u32 %v734, 4294901760
    %736 = vmatmul.f32.gmra.mxu0 %v735
    %v737 = vpop.f32.mrf.mxu0
    %v738 = vadd.f32 %v615, %v737
    %v739 = vand.u32 %v190, 4294901760
    %v740 = vsub.f32 %v190, %v739
    %v741 = vand.u32 %v740, 4294901760
    %742 = vmatmul.f32.gmra.mxu0 %v741
    %v743 = vpop.f32.mrf.mxu0
    %v744 = vadd.f32 %v620, %v743
    %v745 = vand.u32 %v191, 4294901760
    %v746 = vsub.f32 %v191, %v745
    %v747 = vand.u32 %v746, 4294901760
    %748 = vmatmul.f32.gmra.mxu0 %v747
    %v749 = vpop.f32.mrf.mxu0
    %v750 = vadd.f32 %v625, %v749
    %v751 = vand.u32 %v192, 4294901760
    %v752 = vsub.f32 %v192, %v751
    %v753 = vand.u32 %v752, 4294901760
    %754 = vmatmul.f32.gmra.mxu0 %v753
    %v755 = vpop.f32.mrf.mxu0
    %v756 = vadd.f32 %v630, %v755
    %v757 = vand.u32 %v193, 4294901760
    %v758 = vsub.f32 %v193, %v757
    %v759 = vand.u32 %v758, 4294901760
    %760 = vmatmul.f32.gmra.mxu0 %v759
    %v761 = vpop.f32.mrf.mxu0
    %v762 = vadd.f32 %v635, %v761
    %v763 = vand.u32 %v194, 4294901760
    %v764 = vsub.f32 %v194, %v763
    %v765 = vand.u32 %v764, 4294901760
    %766 = vmatmul.f32.gmra.mxu0 %v765
    %v767 = vpop.f32.mrf.mxu0
    %v768 = vadd.f32 %v640, %v767
    %v769 = vand.u32 %v195, 4294901760
    %v770 = vsub.f32 %v195, %v769
    %v771 = vand.u32 %v770, 4294901760
    %772 = vmatmul.f32.gmra.mxu0 %v771
    %v773 = vpop.f32.mrf.mxu0
    %v774 = vadd.f32 %v645, %v773
    %775 = vdwg.mxu0
    %v776 = vand.u32 %v179, 4294901760
    %v777 = vsub.f32 %v179, %v776
    %v778 = vand.u32 %v777, 4294901760
    %779 = vmatpush.msra.mxu0 %v778
    %v780 = vand.u32 %v178, 4294901760
    %v781 = vsub.f32 %v178, %v780
    %v782 = vand.u32 %v781, 4294901760
    %783 = vmatpush.msra.mxu0 %v782
    %v784 = vand.u32 %v177, 4294901760
    %v785 = vsub.f32 %v177, %v784
    %v786 = vand.u32 %v785, 4294901760
    %787 = vmatpush.msra.mxu0 %v786
    %v788 = vand.u32 %v176, 4294901760
    %v789 = vsub.f32 %v176, %v788
    %v790 = vand.u32 %v789, 4294901760
    %791 = vmatpush.msra.mxu0 %v790
    %v792 = vand.u32 %v175, 4294901760
    %v793 = vsub.f32 %v175, %v792
    %v794 = vand.u32 %v793, 4294901760
    %795 = vmatpush.msra.mxu0 %v794
    %v796 = vand.u32 %v174, 4294901760
    %v797 = vsub.f32 %v174, %v796
    %v798 = vand.u32 %v797, 4294901760
    %799 = vmatpush.msra.mxu0 %v798
    %v800 = vand.u32 %v173, 4294901760
    %v801 = vsub.f32 %v173, %v800
    %v802 = vand.u32 %v801, 4294901760
    %803 = vmatpush.msra.mxu0 %v802
    %v804 = vand.u32 %v172, 4294901760
    %v805 = vsub.f32 %v172, %v804
    %v806 = vand.u32 %v805, 4294901760
    %807 = vmatpush.msra.mxu0 %v806
    %v808 = vand.u32 %v171, 4294901760
    %v809 = vsub.f32 %v171, %v808
    %v810 = vand.u32 %v809, 4294901760
    %811 = vmatpush.msra.mxu0 %v810
    %v812 = vand.u32 %v170, 4294901760
    %v813 = vsub.f32 %v170, %v812
    %v814 = vand.u32 %v813, 4294901760
    %815 = vmatpush.msra.mxu0 %v814
    %v816 = vand.u32 %v169, 4294901760
    %v817 = vsub.f32 %v169, %v816
    %v818 = vand.u32 %v817, 4294901760
    %819 = vmatpush.msra.mxu0 %v818
    %v820 = vand.u32 %v168, 4294901760
    %v821 = vsub.f32 %v168, %v820
    %v822 = vand.u32 %v821, 4294901760
    %823 = vmatpush.msra.mxu0 %v822
    %v824 = vand.u32 %v167, 4294901760
    %v825 = vsub.f32 %v167, %v824
    %v826 = vand.u32 %v825, 4294901760
    %827 = vmatpush.msra.mxu0 %v826
    %v828 = vand.u32 %v166, 4294901760
    %v829 = vsub.f32 %v166, %v828
    %v830 = vand.u32 %v829, 4294901760
    %831 = vmatpush.msra.mxu0 %v830
    %v832 = vand.u32 %v165, 4294901760
    %v833 = vsub.f32 %v165, %v832
    %v834 = vand.u32 %v833, 4294901760
    %835 = vmatpush.msra.mxu0 %v834
    %v836 = vand.u32 %v164, 4294901760
    %v837 = vsub.f32 %v164, %v836
    %v838 = vand.u32 %v837, 4294901760
    %839 = vmatpush.msra.mxu0 %v838
    %v840 = vand.u32 %v180, 4294901760
    %841 = vmatmul.f32.gmra.mxu0 %v840
    %v842 = vpop.f32.mrf.mxu0
    %v843 = vadd.f32 %v684, %v842
    %v844 = vand.u32 %v181, 4294901760
    %845 = vmatmul.f32.gmra.mxu0 %v844
    %v846 = vpop.f32.mrf.mxu0
    %v847 = vadd.f32 %v690, %v846
    %v848 = vand.u32 %v182, 4294901760
    %849 = vmatmul.f32.gmra.mxu0 %v848
    %v850 = vpop.f32.mrf.mxu0
    %v851 = vadd.f32 %v696, %v850
    %v852 = vand.u32 %v183, 4294901760
    %853 = vmatmul.f32.gmra.mxu0 %v852
    %v854 = vpop.f32.mrf.mxu0
    %v855 = vadd.f32 %v702, %v854
    %v856 = vand.u32 %v184, 4294901760
    %857 = vmatmul.f32.gmra.mxu0 %v856
    %v858 = vpop.f32.mrf.mxu0
    %v859 = vadd.f32 %v708, %v858
    %v860 = vand.u32 %v185, 4294901760
    %861 = vmatmul.f32.gmra.mxu0 %v860
    %v862 = vpop.f32.mrf.mxu0
    %v863 = vadd.f32 %v714, %v862
    %v864 = vand.u32 %v186, 4294901760
    %865 = vmatmul.f32.gmra.mxu0 %v864
    %v866 = vpop.f32.mrf.mxu0
    %v867 = vadd.f32 %v720, %v866
    %v868 = vand.u32 %v187, 4294901760
    %869 = vmatmul.f32.gmra.mxu0 %v868
    %v870 = vpop.f32.mrf.mxu0
    %v871 = vadd.f32 %v726, %v870
    %v872 = vand.u32 %v188, 4294901760
    %873 = vmatmul.f32.gmra.mxu0 %v872
    %v874 = vpop.f32.mrf.mxu0
    %v875 = vadd.f32 %v732, %v874
    %v876 = vand.u32 %v189, 4294901760
    %877 = vmatmul.f32.gmra.mxu0 %v876
    %v878 = vpop.f32.mrf.mxu0
    %v879 = vadd.f32 %v738, %v878
    %v880 = vand.u32 %v190, 4294901760
    %881 = vmatmul.f32.gmra.mxu0 %v880
    %v882 = vpop.f32.mrf.mxu0
    %v883 = vadd.f32 %v744, %v882
    %v884 = vand.u32 %v191, 4294901760
    %885 = vmatmul.f32.gmra.mxu0 %v884
    %v886 = vpop.f32.mrf.mxu0
    %v887 = vadd.f32 %v750, %v886
    %v888 = vand.u32 %v192, 4294901760
    %889 = vmatmul.f32.gmra.mxu0 %v888
    %v890 = vpop.f32.mrf.mxu0
    %v891 = vadd.f32 %v756, %v890
    %v892 = vand.u32 %v193, 4294901760
    %893 = vmatmul.f32.gmra.mxu0 %v892
    %v894 = vpop.f32.mrf.mxu0
    %v895 = vadd.f32 %v762, %v894
    %v896 = vand.u32 %v194, 4294901760
    %897 = vmatmul.f32.gmra.mxu0 %v896
    %v898 = vpop.f32.mrf.mxu0
    %v899 = vadd.f32 %v768, %v898
    %v900 = vand.u32 %v195, 4294901760
    %901 = vmatmul.f32.gmra.mxu0 %v900
    %v902 = vpop.f32.mrf.mxu0
    %v903 = vadd.f32 %v774, %v902
    %904 = vdwg.mxu0
    %v905 = vand.u32 %v179, 4294901760
    %906 = vmatpush.msra.mxu0 %v905
    %v907 = vand.u32 %v178, 4294901760
    %908 = vmatpush.msra.mxu0 %v907
    %v909 = vand.u32 %v177, 4294901760
    %910 = vmatpush.msra.mxu0 %v909
    %v911 = vand.u32 %v176, 4294901760
    %912 = vmatpush.msra.mxu0 %v911
    %v913 = vand.u32 %v175, 4294901760
    %914 = vmatpush.msra.mxu0 %v913
    %v915 = vand.u32 %v174, 4294901760
    %916 = vmatpush.msra.mxu0 %v915
    %v917 = vand.u32 %v173, 4294901760
    %918 = vmatpush.msra.mxu0 %v917
    %v919 = vand.u32 %v172, 4294901760
    %920 = vmatpush.msra.mxu0 %v919
    %v921 = vand.u32 %v171, 4294901760
    %922 = vmatpush.msra.mxu0 %v921
    %v923 = vand.u32 %v170, 4294901760
    %924 = vmatpush.msra.mxu0 %v923
    %v925 = vand.u32 %v169, 4294901760
    %926 = vmatpush.msra.mxu0 %v925
    %v927 = vand.u32 %v168, 4294901760
    %928 = vmatpush.msra.mxu0 %v927
    %v929 = vand.u32 %v167, 4294901760
    %930 = vmatpush.msra.mxu0 %v929
    %v931 = vand.u32 %v166, 4294901760
    %932 = vmatpush.msra.mxu0 %v931
    %v933 = vand.u32 %v165, 4294901760
    %934 = vmatpush.msra.mxu0 %v933
    %v935 = vand.u32 %v164, 4294901760
    %936 = vmatpush.msra.mxu0 %v935
    %v937 = vand.u32 %v180, 4294901760
    %938 = vmatmul.f32.gmra.mxu0 %v937
    %v939 = vpop.f32.mrf.mxu0
    %v940 = vadd.f32 %v843, %v939
    %v941 = vand.u32 %v181, 4294901760
    %942 = vmatmul.f32.gmra.mxu0 %v941
    %v943 = vpop.f32.mrf.mxu0
    %v944 = vadd.f32 %v847, %v943
    %v945 = vand.u32 %v182, 4294901760
    %946 = vmatmul.f32.gmra.mxu0 %v945
    %v947 = vpop.f32.mrf.mxu0
    %v948 = vadd.f32 %v851, %v947
    %v949 = vand.u32 %v183, 4294901760
    %950 = vmatmul.f32.gmra.mxu0 %v949
    %v951 = vpop.f32.mrf.mxu0
    %v952 = vadd.f32 %v855, %v951
    %v953 = vand.u32 %v184, 4294901760
    %954 = vmatmul.f32.gmra.mxu0 %v953
    %v955 = vpop.f32.mrf.mxu0
    %v956 = vadd.f32 %v859, %v955
    %v957 = vand.u32 %v185, 4294901760
    %958 = vmatmul.f32.gmra.mxu0 %v957
    %v959 = vpop.f32.mrf.mxu0
    %v960 = vadd.f32 %v863, %v959
    %v961 = vand.u32 %v186, 4294901760
    %962 = vmatmul.f32.gmra.mxu0 %v961
    %v963 = vpop.f32.mrf.mxu0
    %v964 = vadd.f32 %v867, %v963
    %v965 = vand.u32 %v187, 4294901760
    %966 = vmatmul.f32.gmra.mxu0 %v965
    %v967 = vpop.f32.mrf.mxu0
    %v968 = vadd.f32 %v871, %v967
    %v969 = vand.u32 %v188, 4294901760
    %970 = vmatmul.f32.gmra.mxu0 %v969
    %v971 = vpop.f32.mrf.mxu0
    %v972 = vadd.f32 %v875, %v971
    %v973 = vand.u32 %v189, 4294901760
    %974 = vmatmul.f32.gmra.mxu0 %v973
    %v975 = vpop.f32.mrf.mxu0
    %v976 = vadd.f32 %v879, %v975
    %v977 = vand.u32 %v190, 4294901760
    %978 = vmatmul.f32.gmra.mxu0 %v977
    %v979 = vpop.f32.mrf.mxu0
    %v980 = vadd.f32 %v883, %v979
    %v981 = vand.u32 %v191, 4294901760
    %982 = vmatmul.f32.gmra.mxu0 %v981
    %v983 = vpop.f32.mrf.mxu0
    %v984 = vadd.f32 %v887, %v983
    %v985 = vand.u32 %v192, 4294901760
    %986 = vmatmul.f32.gmra.mxu0 %v985
    %v987 = vpop.f32.mrf.mxu0
    %v988 = vadd.f32 %v891, %v987
    %v989 = vand.u32 %v193, 4294901760
    %990 = vmatmul.f32.gmra.mxu0 %v989
    %v991 = vpop.f32.mrf.mxu0
    %v992 = vadd.f32 %v895, %v991
    %v993 = vand.u32 %v194, 4294901760
    %994 = vmatmul.f32.gmra.mxu0 %v993
    %v995 = vpop.f32.mrf.mxu0
    %v996 = vadd.f32 %v899, %v995
    %v997 = vand.u32 %v195, 4294901760
    %998 = vmatmul.f32.gmra.mxu0 %v997
    %v999 = vpop.f32.mrf.mxu0
    %v1000 = vadd.f32 %v903, %v999
    %1001 = vdwg.mxu0
    %1002 = vxpose.xlu0.b32.start [1/16] %v940, 128
    %1003 = vxpose.xlu0.b32.cont [2/16] %v944, 128
    %1004 = vxpose.xlu0.b32.cont [3/16] %v948, 128
    %1005 = vxpose.xlu0.b32.cont [4/16] %v952, 128
    %1006 = vxpose.xlu0.b32.cont [5/16] %v956, 128
    %1007 = vxpose.xlu0.b32.cont [6/16] %v960, 128
    %1008 = vxpose.xlu0.b32.cont [7/16] %v964, 128
    %1009 = vxpose.xlu0.b32.cont [8/16] %v968, 128
    %1010 = vxpose.xlu0.b32.cont [9/16] %v972, 128
    %1011 = vxpose.xlu0.b32.cont [10/16] %v976, 128
    %1012 = vxpose.xlu0.b32.cont [11/16] %v980, 128
    %1013 = vxpose.xlu0.b32.cont [12/16] %v984, 128
    %1014 = vxpose.xlu0.b32.cont [13/16] %v988, 128
    %1015 = vxpose.xlu0.b32.cont [14/16] %v992, 128
    %1016 = vxpose.xlu0.b32.cont [15/16] %v996, 128
    %1017 = vxpose.xlu0.b32.end [16/16] %v1000, 128
    %v1018 = vpop.trf.xlu0
    %v1019 = vpop.trf.xlu0
    %v1020 = vpop.trf.xlu0
    %v1021 = vpop.trf.xlu0
    %v1022 = vpop.trf.xlu0
    %v1023 = vpop.trf.xlu0
    %v1024 = vpop.trf.xlu0
    %v1025 = vpop.trf.xlu0
    %v1026 = vpop.trf.xlu0
    %v1027 = vpop.trf.xlu0
    %v1028 = vpop.trf.xlu0
    %v1029 = vpop.trf.xlu0
    %v1030 = vpop.trf.xlu0
    %v1031 = vpop.trf.xlu0
    %v1032 = vpop.trf.xlu0
    %v1033 = vpop.trf.xlu0
    %1034 = vst [vmem:[#allocation8] sm:$0xff] %v1018
    %1035 = vst [vmem:[#allocation8 + $0x8] sm:$0xff] %v1019
    %1036 = vst [vmem:[#allocation8 + $0x10] sm:$0xff] %v1020
    %1037 = vst [vmem:[#allocation8 + $0x18] sm:$0xff] %v1021
    %1038 = vst [vmem:[#allocation8 + $0x20] sm:$0xff] %v1022
    %1039 = vst [vmem:[#allocation8 + $0x28] sm:$0xff] %v1023
    %1040 = vst [vmem:[#allocation8 + $0x30] sm:$0xff] %v1024
    %1041 = vst [vmem:[#allocation8 + $0x38] sm:$0xff] %v1025
    %1042 = vst [vmem:[#allocation8 + $0x40] sm:$0xff] %v1026
    %1043 = vst [vmem:[#allocation8 + $0x48] sm:$0xff] %v1027
    %1044 = vst [vmem:[#allocation8 + $0x50] sm:$0xff] %v1028
    %1045 = vst [vmem:[#allocation8 + $0x58] sm:$0xff] %v1029
    %1046 = vst [vmem:[#allocation8 + $0x60] sm:$0xff] %v1030
    %1047 = vst [vmem:[#allocation8 + $0x68] sm:$0xff] %v1031
    %1048 = vst [vmem:[#allocation8 + $0x70] sm:$0xff] %v1032
    %1049 = vst [vmem:[#allocation8 + $0x78] sm:$0xff] %v1033
    %v1050 = vperm.slane %v79, 0
    %vm1051 = vcmp.eq.s32.totalorder %v1050, %v63
    %vm1052 = vcmp.eq.s32.totalorder %v1050, %v64
    %vm1053 = vcmp.eq.s32.totalorder %v1050, %v65
    %vm1054 = vcmp.eq.s32.totalorder %v1050, %v66
    %vm1055 = vcmp.eq.s32.totalorder %v1050, %v67
    %vm1056 = vcmp.eq.s32.totalorder %v1050, %v68
    %vm1057 = vcmp.eq.s32.totalorder %v1050, %v69
    %vm1058 = vcmp.eq.s32.totalorder %v1050, %v70
    %vm1059 = vcmp.eq.s32.totalorder %v1050, %v71
    %vm1060 = vcmp.eq.s32.totalorder %v1050, %v72
    %vm1061 = vcmp.eq.s32.totalorder %v1050, %v73
    %vm1062 = vcmp.eq.s32.totalorder %v1050, %v74
    %vm1063 = vcmp.eq.s32.totalorder %v1050, %v75
    %vm1064 = vcmp.eq.s32.totalorder %v1050, %v76
    %vm1065 = vcmp.eq.s32.totalorder %v1050, %v77
    %vm1066 = vcmp.eq.s32.totalorder %v1050, %v78
    %v1067 = vsel %vm1051, 1, 0
    %v1068 = vsel %vm1052, 1, 0
    %v1069 = vsel %vm1053, 1, 0
    %v1070 = vsel %vm1054, 1, 0
    %v1071 = vsel %vm1055, 1, 0
    %v1072 = vsel %vm1056, 1, 0
    %v1073 = vsel %vm1057, 1, 0
    %v1074 = vsel %vm1058, 1, 0
    %v1075 = vsel %vm1059, 1, 0
    %v1076 = vsel %vm1060, 1, 0
    %v1077 = vsel %vm1061, 1, 0
    %v1078 = vsel %vm1062, 1, 0
    %v1079 = vsel %vm1063, 1, 0
    %v1080 = vsel %vm1064, 1, 0
    %v1081 = vsel %vm1065, 1, 0
    %v1082 = vsel %vm1066, 1, 0
    %v1083 = vcvt.s32.f32 %v1067
    %v1084 = vcvt.s32.f32 %v1068
    %v1085 = vcvt.s32.f32 %v1069
    %v1086 = vcvt.s32.f32 %v1070
    %v1087 = vcvt.s32.f32 %v1071
    %v1088 = vcvt.s32.f32 %v1072
    %v1089 = vcvt.s32.f32 %v1073
    %v1090 = vcvt.s32.f32 %v1074
    %v1091 = vcvt.s32.f32 %v1075
    %v1092 = vcvt.s32.f32 %v1076
    %v1093 = vcvt.s32.f32 %v1077
    %v1094 = vcvt.s32.f32 %v1078
    %v1095 = vcvt.s32.f32 %v1079
    %v1096 = vcvt.s32.f32 %v1080
    %v1097 = vcvt.s32.f32 %v1081
    %v1098 = vcvt.s32.f32 %v1082
    %v1099 = vsub.f32 %v112, %v1083
    %v1100 = vsub.f32 %v113, %v1084
    %v1101 = vsub.f32 %v114, %v1085
    %v1102 = vsub.f32 %v115, %v1086
    %v1103 = vsub.f32 %v116, %v1087
    %v1104 = vsub.f32 %v117, %v1088
    %v1105 = vsub.f32 %v118, %v1089
    %v1106 = vsub.f32 %v119, %v1090
    %v1107 = vsub.f32 %v120, %v1091
    %v1108 = vsub.f32 %v121, %v1092
    %v1109 = vsub.f32 %v122, %v1093
    %v1110 = vsub.f32 %v123, %v1094
    %v1111 = vsub.f32 %v124, %v1095
    %v1112 = vsub.f32 %v125, %v1096
    %v1113 = vsub.f32 %v126, %v1097
    %v1114 = vsub.f32 %v127, %v1098
    %v1115 = vmul.f32 %v940, %v1099
    %v1116 = vmul.f32 %v944, %v1100
    %v1117 = vmul.f32 %v948, %v1101
    %v1118 = vmul.f32 %v952, %v1102
    %v1119 = vmul.f32 %v956, %v1103
    %v1120 = vmul.f32 %v960, %v1104
    %v1121 = vmul.f32 %v964, %v1105
    %v1122 = vmul.f32 %v968, %v1106
    %v1123 = vmul.f32 %v972, %v1107
    %v1124 = vmul.f32 %v976, %v1108
    %v1125 = vmul.f32 %v980, %v1109
    %v1126 = vmul.f32 %v984, %v1110
    %v1127 = vmul.f32 %v988, %v1111
    %v1128 = vmul.f32 %v992, %v1112
    %v1129 = vmul.f32 %v996, %v1113
    %v1130 = vmul.f32 %v1000, %v1114
    %v1131 = vadd.f32 %v1115, %v1116
    %v1132 = vadd.f32 %v1131, %v1117
    %v1133 = vadd.f32 %v1132, %v1118
    %v1134 = vadd.f32 %v1133, %v1119
    %v1135 = vadd.f32 %v1134, %v1120
    %v1136 = vadd.f32 %v1135, %v1121
    %v1137 = vadd.f32 %v1136, %v1122
    %v1138 = vadd.f32 %v1137, %v1123
    %v1139 = vadd.f32 %v1138, %v1124
    %v1140 = vadd.f32 %v1139, %v1125
    %v1141 = vadd.f32 %v1140, %v1126
    %v1142 = vadd.f32 %v1141, %v1127
    %v1143 = vadd.f32 %v1142, %v1128
    %v1144 = vadd.f32 %v1143, %v1129
    %v1145 = vadd.f32 %v1144, %v1130
    %v1146 = vrot.slane %v1145, 4
    %v1147 = vadd.f32 %v1145, %v1146
    %v1148 = vrot.slane %v1147, 2
    %v1149 = vadd.f32 %v1147, %v1148
    %v1150 = vrot.slane %v1149, 1
    %v1151 = vadd.f32 %v1149, %v1150
    %v1152 = vstv %s130
    %v1153 = vadd.s32 %v1152, %v129
    %vm1154 = vcmp.lt.s32.totalorder %v1153, 16
    %v1155 = vsel %vm1154, 1, 0
    %v1156 = vcvt.s32.f32 %v1155
    %v1157 = vmul.f32 %v1151, %v1156
    %1158 = vst [vmem:[#allocation9] sm:$0x1] %v1157
    // Predicated region
    $region26: #{tpu_custom_call.1} parent=1 // pred_check
      _
    $region27: #{tpu_custom_call.1} parent=1 // pred_check_branch
      %1160 = sbr.rel (0) target = $region29
    $region28: #{tpu_custom_call.1} parent=1 // pred_region
      %1162 = vsyncadd [#allocation4], 0
      %s1163 = sshll.u32 [#allocation8], 4
      %s1164 = int_to_ptr.vmem [resolvable:$true] %s1163
      %s1165 = sshll.u32 %s3, 4
      %s1166 = int_to_ptr.hbm [resolvable:$true] %s1165
      %1171 = dma.vmem_to_hbm [thread:$0]  %s1164, 2048, %s1166, [#allocation4], 128, 128, 8
    $region29: #{tpu_custom_call.1} parent=1 // pred_fallthru
      _
    // Predicated region
    $region30: #{tpu_custom_call.1} parent=1 // pred_check
      _
    $region31: #{tpu_custom_call.1} parent=1 // pred_check_branch
      %1173 = sbr.rel (0) target = $region33
    $region32: #{tpu_custom_call.1} parent=1 // pred_region
      %1175 = vsyncadd [#allocation10], 0
      %s1177 = sshll.u32 [#allocation9], 4
      %s1178 = int_to_ptr.vmem [resolvable:$true] %s1177
      %s1179 = sshll.u32 %s4, 4
      %s1180 = int_to_ptr.hbm [resolvable:$true] %s1179
      %1182 = dma.vmem_to_hbm [thread:$0]  %s1178, 16, %s1180, [#allocation10]
    $region33: #{tpu_custom_call.1} parent=1 // pred_fallthru
      _
    // Predicated region
    $region34: #{tpu_custom_call.1} parent=1 // pred_check
      _
    $region35: #{tpu_custom_call.1} parent=1 // pred_check_branch
      %1184 = sbr.rel (0) target = $region37
    $region36: #{tpu_custom_call.1} parent=1 // pred_region
      %1186 = dma.done [#allocation4], 2048
    $region37: #{tpu_custom_call.1} parent=1 // pred_fallthru
      _
    // Predicated region
    $region38: #{tpu_custom_call.1} parent=1 // pred_check
      _
    $region39: #{tpu_custom_call.1} parent=1 // pred_check_branch
      %1188 = sbr.rel (0) target = $region41
    $region40: #{tpu_custom_call.1} parent=1 // pred_region
      %1190 = dma.done [#allocation10], 16
    $region41: #{tpu_custom_call.1} parent=1 // pred_fallthru
      _
    %1191 = vsyncpa [#allocation3], 1
    %1192 = vsyncpa [#allocation6], 1
    %1193 = vsyncpa [#allocation4], 1
    %1194 = vsyncpa [#allocation10], 1

</llo_original>
